<compile_context>
chip_gen: v6e
topology: v6e:2x2x1
jax: 0.10.0
libtpu: 0.0.40
codegen_flags: <defaults>
</compile_context>

<pallas_src>
import functools
import math

import jax
import jax.numpy as jnp
from jax import lax
from jax.experimental import pallas as pl
from jax.experimental.pallas import tpu as pltpu

_LANE = 128
_SUBLANE = 8
_MASK_VALUE = -1e30  # finite "-inf" for masked (padded) key positions


def _round_up(x: int, m: int) -> int:
    return ((x + m - 1) // m) * m


# ---------------------------------------------------------------------------
# Kernel 1: fused QKV projection.  One MXU pass per sequence tile against the
# resident (E_pad, 3*E_pad) fused weight; Q/K/V sliced at lane-aligned offsets.
# ---------------------------------------------------------------------------
def _qkv_proj_kernel(x_ref, w_ref, q_ref, k_ref, v_ref, *, e_pad):
    qkv = jnp.dot(x_ref[...], w_ref[...], preferred_element_type=jnp.float32)
    q_ref[...] = qkv[:, :e_pad].astype(q_ref.dtype)
    k_ref[...] = qkv[:, e_pad:2 * e_pad].astype(k_ref.dtype)
    v_ref[...] = qkv[:, 2 * e_pad:].astype(v_ref.dtype)


# ---------------------------------------------------------------------------
# Kernel 2: flash-style attention with online softmax.
# No 1/sqrt(d) scaling -- matches the reference module exactly.
# ---------------------------------------------------------------------------
def _flash_attn_kernel(q_ref, k_ref, v_ref, o_ref, m_sc, l_sc, acc_sc,
                       *, seq_len, block_kv, need_mask):
    kv_idx = pl.program_id(1)

    @pl.when(kv_idx == 0)
    def _init():
        m_sc[...] = jnp.full_like(m_sc, -jnp.inf)
        l_sc[...] = jnp.zeros_like(l_sc)
        acc_sc[...] = jnp.zeros_like(acc_sc)

    # scores: contract the embedding axis directly (avoids materializing k.T).
    s = lax.dot_general(q_ref[...], k_ref[...],
                        dimension_numbers=(((1,), (1,)), ((), ())),
                        preferred_element_type=jnp.float32)

    if need_mask:  # static: only emitted when the sequence had to be padded
        col = kv_idx * block_kv + lax.broadcasted_iota(jnp.int32, s.shape, 1)
        s = jnp.where(col < seq_len, s, _MASK_VALUE)

    m_prev = m_sc[...]
    m_new = jnp.maximum(m_prev, jnp.max(s, axis=-1, keepdims=True))
    alpha = jnp.exp(m_prev - m_new)
    p = jnp.exp(s - m_new)
    l_sc[...] = alpha * l_sc[...] + jnp.sum(p, axis=-1, keepdims=True)
    acc_sc[...] = alpha * acc_sc[...] + jnp.dot(
        p.astype(v_ref.dtype), v_ref[...], preferred_element_type=jnp.float32)
    m_sc[...] = m_new

    @pl.when(kv_idx == pl.num_programs(1) - 1)
    def _finalize():
        inv_l = pl.reciprocal(l_sc[...], approx=True)  # EUP slot, VPU stays free
        o_ref[...] = (acc_sc[...] * inv_l).astype(o_ref.dtype)


# ---------------------------------------------------------------------------
# Wrapper
# ---------------------------------------------------------------------------
def kvq_self_attention(x, wq, wk, wv, *, block_s: int = 128):
    """out = softmax((x@WQ) @ (x@WK)^T) @ (x@WV);  x: (S, E), W*: (E, E)."""
    S, E = x.shape
    e_pad = _round_up(E, _LANE)
    blk = min(block_s, _round_up(S, _SUBLANE))  # sequence tile (multiple of 8)
    s_pad = _round_up(S, blk)
    n_tiles = s_pad // blk

    # Zero padding: padded x rows/cols and padded W rows/cols are zero, so the
    # valid region of Q/K/V (and the E-axis contraction in the scores) is
    # unchanged; padded KEY rows are masked inside the attention kernel.
    x_p = jnp.pad(x, ((0, s_pad - S), (0, e_pad - E)))
    pad_w = lambda w: jnp.pad(w, ((0, e_pad - E), (0, e_pad - E)))
    w_qkv = jnp.concatenate([pad_w(wq), pad_w(wk), pad_w(wv)], axis=1)

    seq_spec = pl.BlockSpec((blk, e_pad), lambda i: (i, 0))
    q, k, v = pl.pallas_call(
        functools.partial(_qkv_proj_kernel, e_pad=e_pad),
        grid=(n_tiles,),
        in_specs=[seq_spec,
                  pl.BlockSpec((e_pad, 3 * e_pad), lambda i: (0, 0))],
        out_specs=(seq_spec, seq_spec, seq_spec),
        out_shape=tuple(jax.ShapeDtypeStruct((s_pad, e_pad), x.dtype)
                        for _ in range(3)),
        compiler_params=pltpu.CompilerParams(
            dimension_semantics=("parallel",)),
    )(x_p, w_qkv)

    out_p = pl.pallas_call(
        functools.partial(_flash_attn_kernel, seq_len=S, block_kv=blk,
                          need_mask=(s_pad > S)),
        grid=(n_tiles, n_tiles),
        in_specs=[pl.BlockSpec((blk, e_pad), lambda i, j: (i, 0)),
                  pl.BlockSpec((blk, e_pad), lambda i, j: (j, 0)),
                  pl.BlockSpec((blk, e_pad), lambda i, j: (j, 0))],
        out_specs=pl.BlockSpec((blk, e_pad), lambda i, j: (i, 0)),
        out_shape=jax.ShapeDtypeStruct((s_pad, e_pad), x.dtype),
        scratch_shapes=[pltpu.VMEM((blk, 1), jnp.float32),
                        pltpu.VMEM((blk, 1), jnp.float32),
                        pltpu.VMEM((blk, e_pad), jnp.float32)],
        compiler_params=pltpu.CompilerParams(
            dimension_semantics=("parallel", "arbitrary")),
    )(q, k, v)

    return out_p[:S, :E]


# ---------------------------------------------------------------------------
# Init + reference (pure JAX) for self-test
# ---------------------------------------------------------------------------
def _kaiming_normal(key, shape, a=math.sqrt(5)):
    # torch.nn.init.kaiming_normal_(W, a=sqrt(5)): fan_in = shape[1],
    # gain = sqrt(2 / (1 + a^2)), std = gain / sqrt(fan_in)
    fan_in = shape[1]
    gain = math.sqrt(2.0 / (1.0 + a * a))
    std = gain / math.sqrt(fan_in)
    return std * jax.random.normal(key, shape, dtype=jnp.float32)


def _reference(x, wq, wk, wv):
    q = x @ wq
    k = x @ wk
    v = x @ wv
    a = jax.nn.softmax(q @ k.T, axis=-1)
    return a @ v  # == (V[:, None] * A.T[:, :, None]).sum(0)


if __name__ == "__main__":
    # --- toy shape matching the module spec ---
    S, E = 8, 32
    key = jax.random.PRNGKey(0)
    kx, kq, kk, kv = jax.random.split(key, 4)
    x = jax.random.normal(kx, (S, E), dtype=jnp.float32)
    WQ = _kaiming_normal(kq, (E, E))
    WK = _kaiming_normal(kk, (E, E))
    WV = _kaiming_normal(kv, (E, E))

    out = jax.block_until_ready(kvq_self_attention(x, WQ, WK, WV))
    ref = _reference(x, WQ, WK, WV)
    assert out.shape == (S, E)
    assert jnp.allclose(out, ref, atol=5e-3, rtol=5e-3), \
        float(jnp.max(jnp.abs(out - ref)))

    # --- larger check: exercises the grid, sequence/embedding padding and the
    #     padded-key masking path (S=200 -> 256, E=96 -> 128, grid=(2,2)) ---
    S2, E2 = 200, 96
    k2 = jax.random.split(jax.random.PRNGKey(1), 4)
    x2 = jax.random.normal(k2[0], (S2, E2), dtype=jnp.float32)
    W2 = [_kaiming_normal(k2[i + 1], (E2, E2)) for i in range(3)]
    out2 = jax.block_until_ready(kvq_self_attention(x2, *W2))
    ref2 = _reference(x2, *W2)
    assert out2.shape == (S2, E2)
    assert jnp.allclose(out2, ref2, atol=5e-3, rtol=5e-3), \
        float(jnp.max(jnp.abs(out2 - ref2)))

    print("KERNEL_OK")
</pallas_src>

<mosaic_0001>
module attributes {stable_mosaic.version = 11 : i64} {
  func.func @_qkv_proj_kernel(%arg0: i32, %arg1: memref<8x128xf32, #tpu.memory_space<vmem>>, %arg2: memref<128x384xf32, #tpu.memory_space<vmem>>, %arg3: memref<8x128xf32, #tpu.memory_space<vmem>>, %arg4: memref<8x128xf32, #tpu.memory_space<vmem>>, %arg5: memref<8x128xf32, #tpu.memory_space<vmem>>) attributes {dimension_semantics = [#tpu.dimension_semantics<parallel>], iteration_bounds = array<i64: 1>, scalar_prefetch = 0 : i64, scratch_operands = 0 : i64, tpu.core_type = #tpu.core_type<tc>, window_params = [{transform_indices = @transform_0, window_bounds = array<i64: 8, 128>}, {pipeline_mode = #tpu.pipeline_mode<synchronous>, transform_indices = @transform_1, window_bounds = array<i64: 128, 384>}, {transform_indices = @transform_2, window_bounds = array<i64: 8, 128>}, {transform_indices = @transform_3, window_bounds = array<i64: 8, 128>}, {transform_indices = @transform_4, window_bounds = array<i64: 8, 128>}]} {
    %c0 = arith.constant 0 : index
    %c0_0 = arith.constant 0 : index
    %0 = vector.load %arg1[%c0, %c0_0] : memref<8x128xf32, #tpu.memory_space<vmem>>, vector<8x128xf32>
    %c0_1 = arith.constant 0 : index
    %c0_2 = arith.constant 0 : index
    %1 = vector.load %arg2[%c0_1, %c0_2] : memref<128x384xf32, #tpu.memory_space<vmem>>, vector<128x384xf32>
    %cst = arith.constant dense<0.000000e+00> : vector<8x384xf32>
    %2 = tpu.matmul %0, %1, %cst {dimension_numbers = #tpu.dot_dimension_numbers<[1], [0], [0], [1], [0, 0, 1, 1], [], []>} : vector<8x128xf32>, vector<128x384xf32>, vector<8x384xf32> -> vector<8x384xf32>
    %3 = vector.extract_strided_slice %2 {offsets = [0, 0], sizes = [8, 128], strides = [1, 1]} : vector<8x384xf32> to vector<8x128xf32>
    %c0_3 = arith.constant 0 : index
    %c0_4 = arith.constant 0 : index
    %4 = vector.load %arg3[%c0_3, %c0_4] : memref<8x128xf32, #tpu.memory_space<vmem>>, vector<8x128xf32>
    tpu.vector_store %arg3[%c0_3, %c0_4], %3 {strides = array<i32>} : memref<8x128xf32, #tpu.memory_space<vmem>>, vector<8x128xf32>,
    %5 = vector.extract_strided_slice %2 {offsets = [0, 128], sizes = [8, 128], strides = [1, 1]} : vector<8x384xf32> to vector<8x128xf32>
    %c0_5 = arith.constant 0 : index
    %c0_6 = arith.constant 0 : index
    %6 = vector.load %arg4[%c0_5, %c0_6] : memref<8x128xf32, #tpu.memory_space<vmem>>, vector<8x128xf32>
    tpu.vector_store %arg4[%c0_5, %c0_6], %5 {strides = array<i32>} : memref<8x128xf32, #tpu.memory_space<vmem>>, vector<8x128xf32>,
    %7 = vector.extract_strided_slice %2 {offsets = [0, 256], sizes = [8, 128], strides = [1, 1]} : vector<8x384xf32> to vector<8x128xf32>
    %c0_7 = arith.constant 0 : index
    %c0_8 = arith.constant 0 : index
    %8 = vector.load %arg5[%c0_7, %c0_8] : memref<8x128xf32, #tpu.memory_space<vmem>>, vector<8x128xf32>
    tpu.vector_store %arg5[%c0_7, %c0_8], %7 {strides = array<i32>} : memref<8x128xf32, #tpu.memory_space<vmem>>, vector<8x128xf32>,
    return
  }
  func.func @transform_0(%arg0: i32) -> (i32, i32) {
    %c0_i32 = arith.constant 0 : i32
    %c0_i32_0 = arith.constant 0 : i32
    return %arg0, %c0_i32 : i32, i32
  }
  func.func @transform_1(%arg0: i32) -> (i32, i32) {
    %c0_i32 = arith.constant 0 : i32
    %c0_i32_0 = arith.constant 0 : i32
    %c0_i32_1 = arith.constant 0 : i32
    return %c0_i32, %c0_i32_0 : i32, i32
  }
  func.func @transform_2(%arg0: i32) -> (i32, i32) {
    %c0_i32 = arith.constant 0 : i32
    %c0_i32_0 = arith.constant 0 : i32
    return %arg0, %c0_i32 : i32, i32
  }
  func.func @transform_3(%arg0: i32) -> (i32, i32) {
    %c0_i32 = arith.constant 0 : i32
    %c0_i32_0 = arith.constant 0 : i32
    return %arg0, %c0_i32 : i32, i32
  }
  func.func @transform_4(%arg0: i32) -> (i32, i32) {
    %c0_i32 = arith.constant 0 : i32
    %c0_i32_0 = arith.constant 0 : i32
    return %arg0, %c0_i32 : i32, i32
  }
}

</mosaic_0001>

<llo_original>
// kernel: tpu_custom_call.1
$region0: #{tpu_custom_call.1}
  #allocation0 [shape = 'u32[]', space=smem, size = 0x4, offset = 0x4, fixed_abs, tag = 'smem constant byte address 0x4 - core index']
  #allocation1 [shape = 'u32[144,128]{1,0:T(1,128)}', space=vmem, size = 0x12000, scoped, tag = 'internal scratch']
  %s0 = inlined_call_operand.hbm [shape: f32[8,128], index: 0, kind: input, shape index: {}]
  %s1 = inlined_call_operand.hbm [shape: f32[128,384], index: 1, kind: input, shape index: {}]
  %s2 = inlined_call_operand.hbm [shape: f32[8,128], index: 2, kind: output, shape index: {0}]
  %s3 = inlined_call_operand.hbm [shape: f32[8,128], index: 3, kind: output, shape index: {1}]
  %s4 = inlined_call_operand.hbm [shape: f32[8,128], index: 4, kind: output, shape index: {2}]
  %5 = xla_tuple %s2, %s3, %s4
  %s6 = sld [smem:[#allocation0]]
  $region42: #{tpu_custom_call.1} parent=0
    _
  %s8 = ssub.s32 1, %s6
  %s9 = scalar_select 0, %s8, %s6
  $region1: #{tpu_custom_call.1} parent=0
    #allocation2 [shape = 'u8[4096]{0}', space=vmem, size = 0x1000, scoped, tag = 'input window, operand 0, single buffered']
    #allocation3 [shape = 's32[1]{0}', space=sflag, size = 0x4, scoped, tag = 'scoped memory for tpu_custom_call.1']
    #allocation4 [shape = 's32[1]{0}', space=sflag, size = 0x4, scoped, tag = 'scoped memory for tpu_custom_call.1']
    #allocation5 [shape = 'u8[196608]{0}', space=vmem, size = 0x30000, scoped, tag = 'input window, operand 1, single buffered']
    #allocation6 [shape = 's32[1]{0}', space=sflag, size = 0x4, scoped, tag = 'scoped memory for tpu_custom_call.1']
    #allocation7 [shape = 'u8[4096]{0}', space=vmem, size = 0x1000, scoped, tag = 'output window, operand 0, single buffered']
    #allocation8 [shape = 'u8[4096]{0}', space=vmem, size = 0x1000, scoped, tag = 'output window, operand 1, single buffered']
    #allocation9 [shape = 's32[1]{0}', space=sflag, size = 0x4, scoped, tag = 'scoped memory for tpu_custom_call.1']
    #allocation10 [shape = 'u8[4096]{0}', space=vmem, size = 0x1000, scoped, tag = 'output window, operand 2, single buffered']
    %10 = vsyncpa [#allocation3], 0
    %11 = vsyncpa [#allocation6], 0
    %12 = vsyncpa [#allocation4], 0
    %13 = vsyncpa [#allocation9], 0
    // Predicated region
    $region2: #{tpu_custom_call.1} parent=1 // pred_check
      _
    $region3: #{tpu_custom_call.1} parent=1 // pred_check_branch
      %15 = sbr.rel (0) target = $region5
    $region4: #{tpu_custom_call.1} parent=1 // pred_region
      %s17 = ssub.s32 128, 128
      %18 = vsyncadd [#allocation3], %s17
      %s20 = sshll.u32 [#allocation2], 4
      %s21 = int_to_ptr.vmem [resolvable:$true] %s20
      %23 = dma.hbm_to_vmem [thread:$0]  %s0, 128, %s21, [#allocation3]
    $region5: #{tpu_custom_call.1} parent=1 // pred_fallthru
      _
    // Predicated region
    $region6: #{tpu_custom_call.1} parent=1 // pred_check
      _
    $region7: #{tpu_custom_call.1} parent=1 // pred_check_branch
      %25 = sbr.rel (0) target = $region9
    $region8: #{tpu_custom_call.1} parent=1 // pred_region
      %s27 = ssub.s32 6144, 6144
      %28 = vsyncadd [#allocation6], %s27
      %s29 = sshll.u32 [#allocation5], 4
      %s30 = int_to_ptr.vmem [resolvable:$true] %s29
      %35 = dma.hbm_to_vmem [thread:$0]  %s1, 6144, %s30, [#allocation6], 384, 384, 24
    $region9: #{tpu_custom_call.1} parent=1 // pred_fallthru
      _
    // Predicated region
    $region10: #{tpu_custom_call.1} parent=1 // pred_check
      _
    $region11: #{tpu_custom_call.1} parent=1 // pred_check_branch
      %37 = sbr.rel (0) target = $region13
    $region12: #{tpu_custom_call.1} parent=1 // pred_region
      %38 = dma.done [#allocation3], 128
    $region13: #{tpu_custom_call.1} parent=1 // pred_fallthru
      _
    // Predicated region
    $region14: #{tpu_custom_call.1} parent=1 // pred_check
      _
    $region15: #{tpu_custom_call.1} parent=1 // pred_check_branch
      %40 = sbr.rel (0) target = $region17
    $region16: #{tpu_custom_call.1} parent=1 // pred_region
      %41 = dma.done [#allocation6], 6144
    $region17: #{tpu_custom_call.1} parent=1 // pred_fallthru
      _
    %v42 = vld [vmem:[#allocation2] sm:$0xff]
    %v43 = vld [vmem:[#allocation5] sm:$0xff]
    %v44 = vld [vmem:[#allocation5 + $0x8] sm:$0xff]
    %v45 = vld [vmem:[#allocation5 + $0x10] sm:$0xff]
    %v46 = vld [vmem:[#allocation5 + $0x18] sm:$0xff]
    %v47 = vld [vmem:[#allocation5 + $0x20] sm:$0xff]
    %v48 = vld [vmem:[#allocation5 + $0x28] sm:$0xff]
    %v49 = vld [vmem:[#allocation5 + $0x30] sm:$0xff]
    %v50 = vld [vmem:[#allocation5 + $0x38] sm:$0xff]
    %v51 = vld [vmem:[#allocation5 + $0x40] sm:$0xff]
    %v52 = vld [vmem:[#allocation5 + $0x48] sm:$0xff]
    %v53 = vld [vmem:[#allocation5 + $0x50] sm:$0xff]
    %v54 = vld [vmem:[#allocation5 + $0x58] sm:$0xff]
    %v55 = vld [vmem:[#allocation5 + $0x60] sm:$0xff]
    %v56 = vld [vmem:[#allocation5 + $0x68] sm:$0xff]
    %v57 = vld [vmem:[#allocation5 + $0x70] sm:$0xff]
    %v58 = vld [vmem:[#allocation5 + $0x78] sm:$0xff]
    %v59 = vld [vmem:[#allocation5 + $0x80] sm:$0xff]
    %v60 = vld [vmem:[#allocation5 + $0x88] sm:$0xff]
    %v61 = vld [vmem:[#allocation5 + $0x90] sm:$0xff]
    %v62 = vld [vmem:[#allocation5 + $0x98] sm:$0xff]
    %v63 = vld [vmem:[#allocation5 + $0xa0] sm:$0xff]
    %v64 = vld [vmem:[#allocation5 + $0xa8] sm:$0xff]
    %v65 = vld [vmem:[#allocation5 + $0xb0] sm:$0xff]
    %v66 = vld [vmem:[#allocation5 + $0xb8] sm:$0xff]
    %v67 = vld [vmem:[#allocation5 + $0xc0] sm:$0xff]
    %v68 = vld [vmem:[#allocation5 + $0xc8] sm:$0xff]
    %v69 = vld [vmem:[#allocation5 + $0xd0] sm:$0xff]
    %v70 = vld [vmem:[#allocation5 + $0xd8] sm:$0xff]
    %v71 = vld [vmem:[#allocation5 + $0xe0] sm:$0xff]
    %v72 = vld [vmem:[#allocation5 + $0xe8] sm:$0xff]
    %v73 = vld [vmem:[#allocation5 + $0xf0] sm:$0xff]
    %v74 = vld [vmem:[#allocation5 + $0xf8] sm:$0xff]
    %v75 = vld [vmem:[#allocation5 + $0x100] sm:$0xff]
    %v76 = vld [vmem:[#allocation5 + $0x108] sm:$0xff]
    %v77 = vld [vmem:[#allocation5 + $0x110] sm:$0xff]
    %v78 = vld [vmem:[#allocation5 + $0x118] sm:$0xff]
    %v79 = vld [vmem:[#allocation5 + $0x120] sm:$0xff]
    %v80 = vld [vmem:[#allocation5 + $0x128] sm:$0xff]
    %v81 = vld [vmem:[#allocation5 + $0x130] sm:$0xff]
    %v82 = vld [vmem:[#allocation5 + $0x138] sm:$0xff]
    %v83 = vld [vmem:[#allocation5 + $0x140] sm:$0xff]
    %v84 = vld [vmem:[#allocation5 + $0x148] sm:$0xff]
    %v85 = vld [vmem:[#allocation5 + $0x150] sm:$0xff]
    %v86 = vld [vmem:[#allocation5 + $0x158] sm:$0xff]
    %v87 = vld [vmem:[#allocation5 + $0x160] sm:$0xff]
    %v88 = vld [vmem:[#allocation5 + $0x168] sm:$0xff]
    %v89 = vld [vmem:[#allocation5 + $0x170] sm:$0xff]
    %v90 = vld [vmem:[#allocation5 + $0x178] sm:$0xff]
    %91 = vmatprep.subr.mxu0 %v89
    %92 = vmatpush1.msra.mxu0 %v88
    %93 = vmatprep.subr.mxu0 %v86
    %94 = vmatpush1.msra.mxu0 %v85
    %95 = vmatprep.subr.mxu0 %v83
    %96 = vmatpush1.msra.mxu0 %v82
    %97 = vmatprep.subr.mxu0 %v80
    %98 = vmatpush1.msra.mxu0 %v79
    %99 = vmatprep.subr.mxu0 %v77
    %100 = vmatpush1.msra.mxu0 %v76
    %101 = vmatprep.subr.mxu0 %v74
    %102 = vmatpush1.msra.mxu0 %v73
    %103 = vmatprep.subr.mxu0 %v71
    %104 = vmatpush1.msra.mxu0 %v70
    %105 = vmatprep.subr.mxu0 %v68
    %106 = vmatpush1.msra.mxu0 %v67
    %107 = vmatprep.subr.mxu0 %v65
    %108 = vmatpush1.msra.mxu0 %v64
    %109 = vmatprep.subr.mxu0 %v62
    %110 = vmatpush1.msra.mxu0 %v61
    %111 = vmatprep.subr.mxu0 %v59
    %112 = vmatpush1.msra.mxu0 %v58
    %113 = vmatprep.subr.mxu0 %v56
    %114 = vmatpush1.msra.mxu0 %v55
    %115 = vmatprep.subr.mxu0 %v53
    %116 = vmatpush1.msra.mxu0 %v52
    %117 = vmatprep.subr.mxu0 %v50
    %118 = vmatpush1.msra.mxu0 %v49
    %119 = vmatprep.subr.mxu0 %v47
    %120 = vmatpush1.msra.mxu0 %v46
    %121 = vmatprep.subr.mxu0 %v44
    %122 = vmatpush1.msra.mxu0 %v43
    %123 = vmatprep.subr.mxu0 0.0
    %124 = vmatpush2.msra.mxu0 0.0
    %125 = vmatprep.subr.mxu0 0.0
    %126 = vmatpush2.msra.mxu0 0.0
    %127 = vmatprep.subr.mxu0 0.0
    %128 = vmatpush2.msra.mxu0 0.0
    %129 = vmatprep.subr.mxu0 0.0
    %130 = vmatpush2.msra.mxu0 0.0
    %131 = vmatprep.subr.mxu0 0.0
    %132 = vmatpush2.msra.mxu0 0.0
    %133 = vmatprep.subr.mxu0 0.0
    %134 = vmatpush2.msra.mxu0 0.0
    %135 = vmatprep.subr.mxu0 0.0
    %136 = vmatpush2.msra.mxu0 0.0
    %137 = vmatprep.subr.mxu0 0.0
    %138 = vmatpush2.msra.mxu0 0.0
    %139 = vmatprep.subr.mxu0 0.0
    %140 = vmatpush2.msra.mxu0 0.0
    %141 = vmatprep.subr.mxu0 0.0
    %142 = vmatpush2.msra.mxu0 0.0
    %143 = vmatprep.subr.mxu0 0.0
    %144 = vmatpush2.msra.mxu0 0.0
    %145 = vmatprep.subr.mxu0 0.0
    %146 = vmatpush2.msra.mxu0 0.0
    %147 = vmatprep.subr.mxu0 0.0
    %148 = vmatpush2.msra.mxu0 0.0
    %149 = vmatprep.subr.mxu0 0.0
    %150 = vmatpush2.msra.mxu0 0.0
    %151 = vmatprep.subr.mxu0 0.0
    %152 = vmatpush2.msra.mxu0 0.0
    %153 = vmatprep.subr.mxu0 0.0
    %154 = vmatpush2.msra.mxu0 0.0
    %155 = vmatprep.mubr.f32.mxu0 0.0
    %156 = vmatmul.mubr.f32.gmra.mxu0 %v42
    %v157 = vpop.f32.mrf.mxu0
    %v158 = vadd.f32 0.0, %v157
    %v159 = vpop.f32.mrf.mxu0
    %v160 = vadd.f32 0.0, %v159
    %161 = vdwg.mxu0
    %162 = vmatprep.subr.mxu0 0.0
    %163 = vmatpush1.msra.mxu0 %v90
    %164 = vmatprep.subr.mxu0 0.0
    %165 = vmatpush1.msra.mxu0 %v87
    %166 = vmatprep.subr.mxu0 0.0
    %167 = vmatpush1.msra.mxu0 %v84
    %168 = vmatprep.subr.mxu0 0.0
    %169 = vmatpush1.msra.mxu0 %v81
    %170 = vmatprep.subr.mxu0 0.0
    %171 = vmatpush1.msra.mxu0 %v78
    %172 = vmatprep.subr.mxu0 0.0
    %173 = vmatpush1.msra.mxu0 %v75
    %174 = vmatprep.subr.mxu0 0.0
    %175 = vmatpush1.msra.mxu0 %v72
    %176 = vmatprep.subr.mxu0 0.0
    %177 = vmatpush1.msra.mxu0 %v69
    %178 = vmatprep.subr.mxu0 0.0
    %179 = vmatpush1.msra.mxu0 %v66
    %180 = vmatprep.subr.mxu0 0.0
    %181 = vmatpush1.msra.mxu0 %v63
    %182 = vmatprep.subr.mxu0 0.0
    %183 = vmatpush1.msra.mxu0 %v60
    %184 = vmatprep.subr.mxu0 0.0
    %185 = vmatpush1.msra.mxu0 %v57
    %186 = vmatprep.subr.mxu0 0.0
    %187 = vmatpush1.msra.mxu0 %v54
    %188 = vmatprep.subr.mxu0 0.0
    %189 = vmatpush1.msra.mxu0 %v51
    %190 = vmatprep.subr.mxu0 0.0
    %191 = vmatpush1.msra.mxu0 %v48
    %192 = vmatprep.subr.mxu0 0.0
    %193 = vmatpush1.msra.mxu0 %v45
    %194 = vmatprep.subr.mxu0 0.0
    %195 = vmatpush2.msra.mxu0 0.0
    %196 = vmatprep.subr.mxu0 0.0
    %197 = vmatpush2.msra.mxu0 0.0
    %198 = vmatprep.subr.mxu0 0.0
    %199 = vmatpush2.msra.mxu0 0.0
    %200 = vmatprep.subr.mxu0 0.0
    %201 = vmatpush2.msra.mxu0 0.0
    %202 = vmatprep.subr.mxu0 0.0
    %203 = vmatpush2.msra.mxu0 0.0
    %204 = vmatprep.subr.mxu0 0.0
    %205 = vmatpush2.msra.mxu0 0.0
    %206 = vmatprep.subr.mxu0 0.0
    %207 = vmatpush2.msra.mxu0 0.0
    %208 = vmatprep.subr.mxu0 0.0
    %209 = vmatpush2.msra.mxu0 0.0
    %210 = vmatprep.subr.mxu0 0.0
    %211 = vmatpush2.msra.mxu0 0.0
    %212 = vmatprep.subr.mxu0 0.0
    %213 = vmatpush2.msra.mxu0 0.0
    %214 = vmatprep.subr.mxu0 0.0
    %215 = vmatpush2.msra.mxu0 0.0
    %216 = vmatprep.subr.mxu0 0.0
    %217 = vmatpush2.msra.mxu0 0.0
    %218 = vmatprep.subr.mxu0 0.0
    %219 = vmatpush2.msra.mxu0 0.0
    %220 = vmatprep.subr.mxu0 0.0
    %221 = vmatpush2.msra.mxu0 0.0
    %222 = vmatprep.subr.mxu0 0.0
    %223 = vmatpush2.msra.mxu0 0.0
    %224 = vmatprep.subr.mxu0 0.0
    %225 = vmatpush2.msra.mxu0 0.0
    %226 = vmatprep.mubr.f32.mxu0 0.0
    %227 = vmatmul.mubr.f32.gmra.mxu0 %v42
    %v228 = vpop.f32.mrf.mxu0
    %v229 = vadd.f32 0.0, %v228
    %v230 = vpop.f32.mrf.mxu0
    %231 = vdwg.mxu0
    %232 = vst [vmem:[#allocation7] sm:$0xff] %v158
    %233 = vst [vmem:[#allocation8] sm:$0xff] %v160
    %234 = vst [vmem:[#allocation10] sm:$0xff] %v229
    // Predicated region
    $region18: #{tpu_custom_call.1} parent=1 // pred_check
      _
    $region19: #{tpu_custom_call.1} parent=1 // pred_check_branch
      %236 = sbr.rel (0) target = $region21
    $region20: #{tpu_custom_call.1} parent=1 // pred_region
      %s238 = ssub.s32 128, 128
      %239 = vsyncadd [#allocation4], %s238
      %s241 = sshll.u32 [#allocation7], 4
      %s242 = int_to_ptr.vmem [resolvable:$true] %s241
      %244 = dma.vmem_to_hbm [thread:$0]  %s242, 128, %s2, [#allocation4]
    $region21: #{tpu_custom_call.1} parent=1 // pred_fallthru
      _
    // Predicated region
    $region22: #{tpu_custom_call.1} parent=1 // pred_check
      _
    $region23: #{tpu_custom_call.1} parent=1 // pred_check_branch
      %246 = sbr.rel (0) target = $region25
    $region24: #{tpu_custom_call.1} parent=1 // pred_region
      %s248 = ssub.s32 128, 128
      %249 = vsyncadd [#allocation9], %s248
      %s251 = sshll.u32 [#allocation8], 4
      %s252 = int_to_ptr.vmem [resolvable:$true] %s251
      %254 = dma.vmem_to_hbm [thread:$0]  %s252, 128, %s3, [#allocation9]
    $region25: #{tpu_custom_call.1} parent=1 // pred_fallthru
      _
    // Predicated region
    $region26: #{tpu_custom_call.1} parent=1 // pred_check
      _
    $region27: #{tpu_custom_call.1} parent=1 // pred_check_branch
      %256 = sbr.rel (0) target = $region29
    $region28: #{tpu_custom_call.1} parent=1 // pred_region
      %s258 = ssub.s32 128, 128
      %259 = vsyncadd [#allocation9], %s258
      %s261 = sshll.u32 [#allocation10], 4
      %s262 = int_to_ptr.vmem [resolvable:$true] %s261
      %264 = dma.vmem_to_hbm [thread:$0]  %s262, 128, %s4, [#allocation9]
    $region29: #{tpu_custom_call.1} parent=1 // pred_fallthru
      _
    // Predicated region
    $region30: #{tpu_custom_call.1} parent=1 // pred_check
      _
    $region31: #{tpu_custom_call.1} parent=1 // pred_check_branch
      %266 = sbr.rel (0) target = $region33
    $region32: #{tpu_custom_call.1} parent=1 // pred_region
      %267 = dma.done [#allocation4], 128
    $region33: #{tpu_custom_call.1} parent=1 // pred_fallthru
      _
    // Predicated region
    $region34: #{tpu_custom_call.1} parent=1 // pred_check
      _
    $region35: #{tpu_custom_call.1} parent=1 // pred_check_branch
      %269 = sbr.rel (0) target = $region37
    $region36: #{tpu_custom_call.1} parent=1 // pred_region
      %270 = dma.done [#allocation9], 128
    $region37: #{tpu_custom_call.1} parent=1 // pred_fallthru
      _
    // Predicated region
    $region38: #{tpu_custom_call.1} parent=1 // pred_check
      _
    $region39: #{tpu_custom_call.1} parent=1 // pred_check_branch
      %272 = sbr.rel (0) target = $region41
    $region40: #{tpu_custom_call.1} parent=1 // pred_region
      %273 = dma.done [#allocation9], 128
    $region41: #{tpu_custom_call.1} parent=1 // pred_fallthru
      _
    %274 = vsyncpa [#allocation3], 1
    %275 = vsyncpa [#allocation6], 1
    %276 = vsyncpa [#allocation4], 1
    %277 = vsyncpa [#allocation9], 1

</llo_original>
